<compile_context>
chip_gen: v7x
topology: tpu7x:2x2x1
jax: 0.10.0
libtpu: 0.0.40
codegen_flags: <defaults>
</compile_context>

<pallas_src>
import jax
import jax.numpy as jnp
from jax.experimental import pallas as pl
from jax.experimental.pallas import tpu as pltpu


def _round_up(n, m):
    return ((n + m - 1) // m) * m


def _cdiv(a, b):
    return (a + b - 1) // b


def _choose_tile(batch, max_lanes):
    """Pick the per-block lane count (multiple of 128).

    Small batches -> a single block whose sublane extent equals the full padded
    array dim (always a legal block shape).  Larger batches -> >= 2 blocks
    (engages both v7x TensorCores) with the sublane extent a multiple of 8,
    i.e. the lane tile is a multiple of 1024.
    """
    b128 = _round_up(batch, 128)
    if b128 <= 2048:
        return b128
    n_blocks = max(2, _cdiv(b128, max_lanes))
    return _round_up(_cdiv(b128, n_blocks), 1024)


def simple_nn_kernel(w1_ref, b1_ref, w2_ref, b2_ref, x_ref, o_ref):
    # x_ref: (2, SB, 128) f32 in VMEM -- (feature, sublane-row, lane); batch on
    #        the dense last two dims.
    # o_ref: (SB, 128) f32 in VMEM.
    # w1_ref: (2, 4), b1_ref: (4,), w2_ref: (4,), b2_ref: (1,) -- f32 in SMEM.
    x0 = x_ref[0]  # (SB, 128)
    x1 = x_ref[1]  # (SB, 128)

    # fc1 + ReLU: 8 broadcast FMAs on the VPU
    #   h_j = relu(w1[0, j] * x0 + w1[1, j] * x1 + b1[j])
    h0 = jnp.maximum(w1_ref[0, 0] * x0 + w1_ref[1, 0] * x1 + b1_ref[0], 0.0)
    h1 = jnp.maximum(w1_ref[0, 1] * x0 + w1_ref[1, 1] * x1 + b1_ref[1], 0.0)
    h2 = jnp.maximum(w1_ref[0, 2] * x0 + w1_ref[1, 2] * x1 + b1_ref[2], 0.0)
    h3 = jnp.maximum(w1_ref[0, 3] * x0 + w1_ref[1, 3] * x1 + b1_ref[3], 0.0)

    # fc2 (b2 folded into the FMA chain), then sigmoid as a single EUP tanh:
    #   sigmoid(z) = 0.5 + 0.5 * tanh(0.5 * z)   (mathematically exact)
    z = (w2_ref[0] * h0 + w2_ref[1] * h1 + w2_ref[2] * h2
         + (w2_ref[3] * h3 + b2_ref[0]))
    o_ref[...] = 0.5 + 0.5 * jnp.tanh(0.5 * z)


def simple_nn_forward_feature_major(xt, w1, b1, w2, b2, *, block_lanes=256 * 1024):
    """Fast path.  xt: (2, B) float32, feature-major.  Returns (B,) float32.

    No wrapper transpose; the (2,B)->(2,B/128,128) and (B/128,128)->(B,) reshapes
    are row-major merges/splits (free), and pad/slice are no-ops when B is a
    multiple of the chosen lane tile, so the only HBM traffic is the kernel's
    own ~12 B/element.
    """
    f, batch = xt.shape
    assert f == 2, xt.shape
    xt = xt.astype(jnp.float32)

    tb = _choose_tile(batch, block_lanes)   # lanes per block (multiple of 128)
    bp = _round_up(batch, tb)               # padded batch
    if bp != batch:
        xt = jnp.pad(xt, ((0, 0), (0, bp - batch)))

    n_rows = bp // 128                      # sublane rows of the padded batch
    sb = tb // 128                          # sublane rows per block
    x3 = xt.reshape(2, n_rows, 128)         # zero-copy row-major reshape

    smem = pl.BlockSpec(memory_space=pltpu.MemorySpace.SMEM)

    out = pl.pallas_call(
        simple_nn_kernel,
        out_shape=jax.ShapeDtypeStruct((n_rows, 128), jnp.float32),
        grid=(bp // tb,),
        in_specs=[
            smem,  # w1 (2, 4)
            smem,  # b1 (4,)
            smem,  # w2 (4,)
            smem,  # b2 (1,)
            pl.BlockSpec((2, sb, 128), lambda i: (0, i, 0)),  # x, dense tiles
        ],
        out_specs=pl.BlockSpec((sb, 128), lambda i: (i, 0)),  # dense output tiles
        compiler_params=pltpu.CompilerParams(
            dimension_semantics=("parallel",),   # shards batch across TCs (v7x)
            vmem_limit_bytes=32 * 1024 * 1024,
        ),
    )(
        w1.astype(jnp.float32),
        b1.astype(jnp.float32),
        w2.astype(jnp.float32),
        b2.astype(jnp.float32),
        x3,
    )

    flat = out.reshape(bp)
    # Padded tail lanes hold sigmoid of bias-only values; they are sliced off
    # here and must not be reduced over before this slice.
    return flat[:batch] if bp != batch else flat


def simple_nn_forward(x, w1, b1, w2, b2, **kwargs):
    """PyTorch-shaped entry point: x (B, 2) float32 -> (B, 1) float32.

    The transpose below is one extra HBM pass over the input; callers that can
    supply feature-major (2, B) data should use
    `simple_nn_forward_feature_major` directly for peak end-to-end bandwidth.
    """
    batch = x.shape[0]
    y = simple_nn_forward_feature_major(
        x.astype(jnp.float32).T, w1, b1, w2, b2, **kwargs)
    return y.reshape(batch, 1)


def init_params(key):
    """Deterministic init matching the PyTorch module's shapes.

    fc1: Linear(2, 4) -> W1 stored pre-transposed as (2, 4), b1 as (4,)
    fc2: Linear(4, 1) -> W2 stored flattened as (4,),        b2 as (1,)
    """
    k1, k2, k3, k4 = jax.random.split(key, 4)
    w1 = jax.random.uniform(k1, (2, 4), jnp.float32, minval=-0.5, maxval=0.5)
    b1 = jax.random.uniform(k2, (4,), jnp.float32, minval=-0.5, maxval=0.5)
    w2 = jax.random.uniform(k3, (4,), jnp.float32, minval=-0.5, maxval=0.5)
    b2 = jax.random.uniform(k4, (1,), jnp.float32, minval=-0.5, maxval=0.5)
    return w1, b1, w2, b2


def reference_forward(x, w1, b1, w2, b2):
    h = jnp.maximum(x @ w1 + b1, 0.0)   # (B, 4)
    z = h @ w2 + b2[0]                  # (B,)
    return jax.nn.sigmoid(z)[:, None]   # (B, 1)


if __name__ == "__main__":
    key = jax.random.PRNGKey(0)
    kx, kp, kx2 = jax.random.split(key, 3)

    w1, b1, w2, b2 = init_params(kp)

    # Small batch consistent with the module (Linear(2,4) -> ReLU -> Linear(4,1) -> Sigmoid).
    batch = 8
    x = jax.random.normal(kx, (batch, 2), jnp.float32)
    out = jax.block_until_ready(simple_nn_forward(x, w1, b1, w2, b2))
    ref = reference_forward(x, w1, b1, w2, b2)
    assert out.shape == (batch, 1)
    assert jnp.allclose(out, ref, atol=3e-5, rtol=3e-5), (out, ref)

    # Second check exercising the multi-block (>= 2 grid steps, pad-free) path.
    batch2 = 4096
    x2 = jax.random.normal(kx2, (batch2, 2), jnp.float32)
    out2 = jax.block_until_ready(simple_nn_forward(x2, w1, b1, w2, b2))
    ref2 = reference_forward(x2, w1, b1, w2, b2)
    assert out2.shape == (batch2, 1)
    assert jnp.allclose(out2, ref2, atol=3e-5, rtol=3e-5)

    print("KERNEL_OK")
</pallas_src>

<mosaic_0001>
module attributes {stable_mosaic.version = 11 : i64} {
  func.func @simple_nn_kernel(%arg0: i32, %arg1: memref<2x4xf32, #tpu.memory_space<smem>>, %arg2: memref<4xf32, #tpu.memory_space<smem>>, %arg3: memref<4xf32, #tpu.memory_space<smem>>, %arg4: memref<1xf32, #tpu.memory_space<smem>>, %arg5: memref<2x1x128xf32, #tpu.memory_space<vmem>>, %arg6: memref<1x128xf32, #tpu.memory_space<vmem>>) attributes {dimension_semantics = [#tpu.dimension_semantics<parallel>], iteration_bounds = array<i64: 1>, scalar_prefetch = 0 : i64, scratch_operands = 0 : i64, tpu.core_type = #tpu.core_type<tc>, window_params = [{transform_indices = @transform_0, window_bounds = array<i64: 2, 4>}, {transform_indices = @transform_1, window_bounds = array<i64: 4>}, {transform_indices = @transform_2, window_bounds = array<i64: 4>}, {transform_indices = @transform_3, window_bounds = array<i64: 1>}, {transform_indices = @transform_4, window_bounds = array<i64: 2, 1, 128>}, {transform_indices = @transform_5, window_bounds = array<i64: 1, 128>}]} {
    %c0 = arith.constant 0 : index
    %c0_0 = arith.constant 0 : index
    %c0_1 = arith.constant 0 : index
    %0 = vector.load %arg5[%c0, %c0_0, %c0_1] : memref<2x1x128xf32, #tpu.memory_space<vmem>>, vector<1x1x128xf32>
    %1 = vector.shape_cast %0 : vector<1x1x128xf32> to vector<1x128xf32>
    %c1 = arith.constant 1 : index
    %c0_2 = arith.constant 0 : index
    %c0_3 = arith.constant 0 : index
    %2 = vector.load %arg5[%c1, %c0_2, %c0_3] : memref<2x1x128xf32, #tpu.memory_space<vmem>>, vector<1x1x128xf32>
    %3 = vector.shape_cast %2 : vector<1x1x128xf32> to vector<1x128xf32>
    %c0_4 = arith.constant 0 : index
    %c0_5 = arith.constant 0 : index
    %4 = memref.load %arg1[%c0_4, %c0_5] : memref<2x4xf32, #tpu.memory_space<smem>>
    %5 = vector.broadcast %4 : f32 to vector<1x128xf32>
    %6 = arith.mulf %5, %1 : vector<1x128xf32>
    %c1_6 = arith.constant 1 : index
    %c0_7 = arith.constant 0 : index
    %7 = memref.load %arg1[%c1_6, %c0_7] : memref<2x4xf32, #tpu.memory_space<smem>>
    %8 = vector.broadcast %7 : f32 to vector<1x128xf32>
    %9 = arith.mulf %8, %3 : vector<1x128xf32>
    %10 = arith.addf %6, %9 : vector<1x128xf32>
    %c0_8 = arith.constant 0 : index
    %11 = memref.load %arg2[%c0_8] : memref<4xf32, #tpu.memory_space<smem>>
    %12 = vector.broadcast %11 : f32 to vector<1x128xf32>
    %13 = arith.addf %10, %12 : vector<1x128xf32>
    %cst = arith.constant 0.000000e+00 : f32
    %14 = vector.broadcast %cst : f32 to vector<1x128xf32>
    %15 = arith.maximumf %13, %14 : vector<1x128xf32>
    %c0_9 = arith.constant 0 : index
    %c1_10 = arith.constant 1 : index
    %16 = memref.load %arg1[%c0_9, %c1_10] : memref<2x4xf32, #tpu.memory_space<smem>>
    %17 = vector.broadcast %16 : f32 to vector<1x128xf32>
    %18 = arith.mulf %17, %1 : vector<1x128xf32>
    %c1_11 = arith.constant 1 : index
    %c1_12 = arith.constant 1 : index
    %19 = memref.load %arg1[%c1_11, %c1_12] : memref<2x4xf32, #tpu.memory_space<smem>>
    %20 = vector.broadcast %19 : f32 to vector<1x128xf32>
    %21 = arith.mulf %20, %3 : vector<1x128xf32>
    %22 = arith.addf %18, %21 : vector<1x128xf32>
    %c1_13 = arith.constant 1 : index
    %23 = memref.load %arg2[%c1_13] : memref<4xf32, #tpu.memory_space<smem>>
    %24 = vector.broadcast %23 : f32 to vector<1x128xf32>
    %25 = arith.addf %22, %24 : vector<1x128xf32>
    %cst_14 = arith.constant 0.000000e+00 : f32
    %26 = vector.broadcast %cst_14 : f32 to vector<1x128xf32>
    %27 = arith.maximumf %25, %26 : vector<1x128xf32>
    %c0_15 = arith.constant 0 : index
    %c2 = arith.constant 2 : index
    %28 = memref.load %arg1[%c0_15, %c2] : memref<2x4xf32, #tpu.memory_space<smem>>
    %29 = vector.broadcast %28 : f32 to vector<1x128xf32>
    %30 = arith.mulf %29, %1 : vector<1x128xf32>
    %c1_16 = arith.constant 1 : index
    %c2_17 = arith.constant 2 : index
    %31 = memref.load %arg1[%c1_16, %c2_17] : memref<2x4xf32, #tpu.memory_space<smem>>
    %32 = vector.broadcast %31 : f32 to vector<1x128xf32>
    %33 = arith.mulf %32, %3 : vector<1x128xf32>
    %34 = arith.addf %30, %33 : vector<1x128xf32>
    %c2_18 = arith.constant 2 : index
    %35 = memref.load %arg2[%c2_18] : memref<4xf32, #tpu.memory_space<smem>>
    %36 = vector.broadcast %35 : f32 to vector<1x128xf32>
    %37 = arith.addf %34, %36 : vector<1x128xf32>
    %cst_19 = arith.constant 0.000000e+00 : f32
    %38 = vector.broadcast %cst_19 : f32 to vector<1x128xf32>
    %39 = arith.maximumf %37, %38 : vector<1x128xf32>
    %c0_20 = arith.constant 0 : index
    %c3 = arith.constant 3 : index
    %40 = memref.load %arg1[%c0_20, %c3] : memref<2x4xf32, #tpu.memory_space<smem>>
    %41 = vector.broadcast %40 : f32 to vector<1x128xf32>
    %42 = arith.mulf %41, %1 : vector<1x128xf32>
    %c1_21 = arith.constant 1 : index
    %c3_22 = arith.constant 3 : index
    %43 = memref.load %arg1[%c1_21, %c3_22] : memref<2x4xf32, #tpu.memory_space<smem>>
    %44 = vector.broadcast %43 : f32 to vector<1x128xf32>
    %45 = arith.mulf %44, %3 : vector<1x128xf32>
    %46 = arith.addf %42, %45 : vector<1x128xf32>
    %c3_23 = arith.constant 3 : index
    %47 = memref.load %arg2[%c3_23] : memref<4xf32, #tpu.memory_space<smem>>
    %48 = vector.broadcast %47 : f32 to vector<1x128xf32>
    %49 = arith.addf %46, %48 : vector<1x128xf32>
    %cst_24 = arith.constant 0.000000e+00 : f32
    %50 = vector.broadcast %cst_24 : f32 to vector<1x128xf32>
    %51 = arith.maximumf %49, %50 : vector<1x128xf32>
    %c0_25 = arith.constant 0 : index
    %52 = memref.load %arg3[%c0_25] : memref<4xf32, #tpu.memory_space<smem>>
    %53 = vector.broadcast %52 : f32 to vector<1x128xf32>
    %54 = arith.mulf %53, %15 : vector<1x128xf32>
    %c1_26 = arith.constant 1 : index
    %55 = memref.load %arg3[%c1_26] : memref<4xf32, #tpu.memory_space<smem>>
    %56 = vector.broadcast %55 : f32 to vector<1x128xf32>
    %57 = arith.mulf %56, %27 : vector<1x128xf32>
    %58 = arith.addf %54, %57 : vector<1x128xf32>
    %c2_27 = arith.constant 2 : index
    %59 = memref.load %arg3[%c2_27] : memref<4xf32, #tpu.memory_space<smem>>
    %60 = vector.broadcast %59 : f32 to vector<1x128xf32>
    %61 = arith.mulf %60, %39 : vector<1x128xf32>
    %62 = arith.addf %58, %61 : vector<1x128xf32>
    %c3_28 = arith.constant 3 : index
    %63 = memref.load %arg3[%c3_28] : memref<4xf32, #tpu.memory_space<smem>>
    %64 = vector.broadcast %63 : f32 to vector<1x128xf32>
    %65 = arith.mulf %64, %51 : vector<1x128xf32>
    %c0_29 = arith.constant 0 : index
    %66 = memref.load %arg4[%c0_29] : memref<1xf32, #tpu.memory_space<smem>>
    %67 = vector.broadcast %66 : f32 to vector<1x128xf32>
    %68 = arith.addf %65, %67 : vector<1x128xf32>
    %69 = arith.addf %62, %68 : vector<1x128xf32>
    %cst_30 = arith.constant 5.000000e-01 : f32
    %70 = vector.broadcast %cst_30 : f32 to vector<1x128xf32>
    %71 = arith.mulf %70, %69 : vector<1x128xf32>
    %72 = math.tanh %71 : vector<1x128xf32>
    %cst_31 = arith.constant 5.000000e-01 : f32
    %73 = vector.broadcast %cst_31 : f32 to vector<1x128xf32>
    %74 = arith.mulf %73, %72 : vector<1x128xf32>
    %cst_32 = arith.constant 5.000000e-01 : f32
    %75 = vector.broadcast %cst_32 : f32 to vector<1x128xf32>
    %76 = arith.addf %75, %74 : vector<1x128xf32>
    %c0_33 = arith.constant 0 : index
    %c0_34 = arith.constant 0 : index
    %77 = vector.load %arg6[%c0_33, %c0_34] : memref<1x128xf32, #tpu.memory_space<vmem>>, vector<1x128xf32>
    tpu.vector_store %arg6[%c0_33, %c0_34], %76 {strides = array<i32>} : memref<1x128xf32, #tpu.memory_space<vmem>>, vector<1x128xf32>,
    return
  }
  func.func @transform_0(%arg0: i32) -> (i32, i32) {
    %c0_i32 = arith.constant 0 : i32
    %c0_i32_0 = arith.constant 0 : i32
    %c0_i32_1 = arith.constant 0 : i32
    return %c0_i32, %c0_i32_0 : i32, i32
  }
  func.func @transform_1(%arg0: i32) -> i32 {
    %c0_i32 = arith.constant 0 : i32
    %c0_i32_0 = arith.constant 0 : i32
    return %c0_i32 : i32
  }
  func.func @transform_2(%arg0: i32) -> i32 {
    %c0_i32 = arith.constant 0 : i32
    %c0_i32_0 = arith.constant 0 : i32
    return %c0_i32 : i32
  }
  func.func @transform_3(%arg0: i32) -> i32 {
    %c0_i32 = arith.constant 0 : i32
    %c0_i32_0 = arith.constant 0 : i32
    return %c0_i32 : i32
  }
  func.func @transform_4(%arg0: i32) -> (i32, i32, i32) {
    %c0_i32 = arith.constant 0 : i32
    %c0_i32_0 = arith.constant 0 : i32
    %c0_i32_1 = arith.constant 0 : i32
    return %c0_i32, %arg0, %c0_i32_0 : i32, i32, i32
  }
  func.func @transform_5(%arg0: i32) -> (i32, i32) {
    %c0_i32 = arith.constant 0 : i32
    %c0_i32_0 = arith.constant 0 : i32
    return %arg0, %c0_i32 : i32, i32
  }
}

</mosaic_0001>

<llo_original>
// kernel: tpu_custom_call.1
$region0: #{tpu_custom_call.1}
  #allocation0 [shape = 'u32[]', space=smem, size = 0x4, offset = 0x4, fixed_abs, tag = 'smem constant byte address 0x4 - core index']
  #allocation1 [shape = 'u32[144,128]{1,0:T(1,128)}', space=vmem, size = 0x12000, scoped, tag = 'internal scratch']
  #allocation2 [shape = 'f32[1]{0:T(128)S(6)}', space=smem, size = 0x200, scoped, tag = 'scoped memory for tpu_custom_call.1']
  %s0 = inlined_call_operand.vmem [shape: f32[2,4], index: 0, kind: input, shape index: {}]
  %s1 = inlined_call_operand.vmem [shape: f32[4], index: 1, kind: input, shape index: {}]
  %s2 = inlined_call_operand.vmem [shape: f32[4], index: 2, kind: input, shape index: {}]
  %s3 = inlined_call_operand.<no memory space> [shape: f32[1], index: 3, kind: input, shape index: {}]
  %s4 = inlined_call_operand.vmem [shape: f32[2,1,128], index: 4, kind: input, shape index: {}]
  %s5 = inlined_call_operand.hbm [shape: f32[1,128], index: 5, kind: output, shape index: {}]
  %s6 = sld [smem:[#allocation0]]
  $region42: #{tpu_custom_call.1} parent=0
    _
  %s8 = ssub.s32 1, %s6
  %s9 = scalar_select 0, %s8, %s6
  %10 = sst [smem:[#allocation2]] %s3
  $region1: #{tpu_custom_call.1} parent=0
    #allocation3 [shape = 'u8[1024]{0}', space=smem, size = 0x400, scoped, tag = 'input window, operand 0, single buffered']
    #allocation4 [shape = 's32[1]{0}', space=sflag, size = 0x4, scoped, tag = 'scoped memory for tpu_custom_call.1']
    #allocation5 [shape = 's32[1]{0}', space=sflag, size = 0x4, scoped, tag = 'scoped memory for tpu_custom_call.1']
    #allocation6 [shape = 'u8[512]{0}', space=smem, size = 0x200, scoped, tag = 'input window, operand 1, single buffered']
    #allocation7 [shape = 's32[1]{0}', space=sflag, size = 0x4, scoped, tag = 'scoped memory for tpu_custom_call.1']
    #allocation8 [shape = 'u8[512]{0}', space=smem, size = 0x200, scoped, tag = 'input window, operand 2, single buffered']
    #allocation9 [shape = 'u8[512]{0}', space=vmem, size = 0x400, scoped, tag = 'output window, operand 0, single buffered']
    %11 = vsyncpa [#allocation5], 0
    %12 = vsyncpa [#allocation7], 0
    %13 = vsyncpa [#allocation4], 0
    // Predicated region
    $region2: #{tpu_custom_call.1} parent=1 // pred_check
      _
    $region3: #{tpu_custom_call.1} parent=1 // pred_check_branch
      %15 = sbr.rel (0) target = $region5
    $region4: #{tpu_custom_call.1} parent=1 // pred_region
      %s17 = ssub.s32 32, 32
      %18 = vsyncadd [#allocation5], %s17
      %s20 = sshll.u32 %s0, 4
      %s21 = int_to_ptr.vmem [resolvable:$true] %s20
      %23 = dma.vmem_to_smem %s21, 32, [#allocation3], [#allocation5]
    $region5: #{tpu_custom_call.1} parent=1 // pred_fallthru
      _
    // Predicated region
    $region6: #{tpu_custom_call.1} parent=1 // pred_check
      _
    $region7: #{tpu_custom_call.1} parent=1 // pred_check_branch
      %25 = sbr.rel (0) target = $region9
    $region8: #{tpu_custom_call.1} parent=1 // pred_region
      %s27 = ssub.s32 16, 16
      %28 = vsyncadd [#allocation7], %s27
      %s30 = sshll.u32 %s1, 4
      %s31 = int_to_ptr.vmem [resolvable:$true] %s30
      %33 = dma.vmem_to_smem %s31, 16, [#allocation6], [#allocation7]
    $region9: #{tpu_custom_call.1} parent=1 // pred_fallthru
      _
    // Predicated region
    $region10: #{tpu_custom_call.1} parent=1 // pred_check
      _
    $region11: #{tpu_custom_call.1} parent=1 // pred_check_branch
      %35 = sbr.rel (0) target = $region13
    $region12: #{tpu_custom_call.1} parent=1 // pred_region
      %s37 = ssub.s32 16, 16
      %38 = vsyncadd [#allocation7], %s37
      %s40 = sshll.u32 %s2, 4
      %s41 = int_to_ptr.vmem [resolvable:$true] %s40
      %43 = dma.vmem_to_smem %s41, 16, [#allocation8], [#allocation7]
    $region13: #{tpu_custom_call.1} parent=1 // pred_fallthru
      _
    // Predicated region
    $region14: #{tpu_custom_call.1} parent=1 // pred_check
      _
    $region15: #{tpu_custom_call.1} parent=1 // pred_check_branch
      %45 = sbr.rel (0) target = $region17
    $region16: #{tpu_custom_call.1} parent=1 // pred_region
      _
    $region17: #{tpu_custom_call.1} parent=1 // pred_fallthru
      _
    // Predicated region
    $region18: #{tpu_custom_call.1} parent=1 // pred_check
      _
    $region19: #{tpu_custom_call.1} parent=1 // pred_check_branch
      %47 = sbr.rel (0) target = $region21
    $region20: #{tpu_custom_call.1} parent=1 // pred_region
      _
    $region21: #{tpu_custom_call.1} parent=1 // pred_fallthru
      _
    // Predicated region
    $region22: #{tpu_custom_call.1} parent=1 // pred_check
      _
    $region23: #{tpu_custom_call.1} parent=1 // pred_check_branch
      %49 = sbr.rel (0) target = $region25
    $region24: #{tpu_custom_call.1} parent=1 // pred_region
      %50 = dma.done [#allocation5], 32
    $region25: #{tpu_custom_call.1} parent=1 // pred_fallthru
      _
    // Predicated region
    $region26: #{tpu_custom_call.1} parent=1 // pred_check
      _
    $region27: #{tpu_custom_call.1} parent=1 // pred_check_branch
      %52 = sbr.rel (0) target = $region29
    $region28: #{tpu_custom_call.1} parent=1 // pred_region
      %53 = dma.done [#allocation7], 16
    $region29: #{tpu_custom_call.1} parent=1 // pred_fallthru
      _
    // Predicated region
    $region30: #{tpu_custom_call.1} parent=1 // pred_check
      _
    $region31: #{tpu_custom_call.1} parent=1 // pred_check_branch
      %55 = sbr.rel (0) target = $region33
    $region32: #{tpu_custom_call.1} parent=1 // pred_region
      %56 = dma.done [#allocation7], 16
    $region33: #{tpu_custom_call.1} parent=1 // pred_fallthru
      _
    %57 = sfence
    %v58 = vld [vmem:[%s4] sm:$0x1]
    %s59 = scalar_lea.vmem %s4, 1
    %v60 = vld [vmem:[%s59] sm:$0x1]
    %s61 = sld [smem:[#allocation3]]
    %v62 = vstv %s61
    %v63 = vmul.f32 %v62, %v58
    %s64 = sld [smem:[#allocation3 + $0x80]]
    %v65 = vstv %s64
    %v66 = vmul.f32 %v65, %v60
    %v67 = vadd.f32 %v63, %v66
    %s68 = sld [smem:[#allocation6]]
    %v69 = vstv %s68
    %v70 = vadd.f32 %v67, %v69
    %v71 = vmax.f32 %v70, 0.0
    %s72 = sld [smem:[#allocation3 + $0x1]]
    %v73 = vstv %s72
    %v74 = vmul.f32 %v73, %v58
    %s75 = sld [smem:[#allocation3 + $0x81]]
    %v76 = vstv %s75
    %v77 = vmul.f32 %v76, %v60
    %v78 = vadd.f32 %v74, %v77
    %s79 = sld [smem:[#allocation6 + $0x1]]
    %v80 = vstv %s79
    %v81 = vadd.f32 %v78, %v80
    %v82 = vmax.f32 %v81, 0.0
    %s83 = sld [smem:[#allocation3 + $0x2]]
    %v84 = vstv %s83
    %v85 = vmul.f32 %v84, %v58
    %s86 = sld [smem:[#allocation3 + $0x82]]
    %v87 = vstv %s86
    %v88 = vmul.f32 %v87, %v60
    %v89 = vadd.f32 %v85, %v88
    %s90 = sld [smem:[#allocation6 + $0x2]]
    %v91 = vstv %s90
    %v92 = vadd.f32 %v89, %v91
    %v93 = vmax.f32 %v92, 0.0
    %s94 = sld [smem:[#allocation3 + $0x3]]
    %v95 = vstv %s94
    %v96 = vmul.f32 %v95, %v58
    %s97 = sld [smem:[#allocation3 + $0x83]]
    %v98 = vstv %s97
    %v99 = vmul.f32 %v98, %v60
    %v100 = vadd.f32 %v96, %v99
    %s101 = sld [smem:[#allocation6 + $0x3]]
    %v102 = vstv %s101
    %v103 = vadd.f32 %v100, %v102
    %v104 = vmax.f32 %v103, 0.0
    %s105 = sld [smem:[#allocation8]]
    %v106 = vstv %s105
    %v107 = vmul.f32 %v106, %v71
    %s108 = sld [smem:[#allocation8 + $0x1]]
    %v109 = vstv %s108
    %v110 = vmul.f32 %v109, %v82
    %v111 = vadd.f32 %v107, %v110
    %s112 = sld [smem:[#allocation8 + $0x2]]
    %v113 = vstv %s112
    %v114 = vmul.f32 %v113, %v93
    %v115 = vadd.f32 %v111, %v114
    %s116 = sld [smem:[#allocation8 + $0x3]]
    %v117 = vstv %s116
    %v118 = vmul.f32 %v117, %v104
    %s119 = sld [smem:[#allocation2]]
    %v120 = vstv %s119
    %v121 = vadd.f32 %v118, %v120
    %v122 = vadd.f32 %v115, %v121
    %v123 = vmul.f32 %v122, 0.5
    %v124 = vtanh.pop %v123
    %v125 = vmul.f32 %v124, 0.5
    %v126 = vadd.f32 %v125, 0.5
    %127 = vst [vmem:[#allocation9] sm:$0x1] %v126
    // Predicated region
    $region34: #{tpu_custom_call.1} parent=1 // pred_check
      _
    $region35: #{tpu_custom_call.1} parent=1 // pred_check_branch
      %129 = sbr.rel (0) target = $region37
    $region36: #{tpu_custom_call.1} parent=1 // pred_region
      %s131 = ssub.s32 16, 16
      %132 = vsyncadd [#allocation4], %s131
      %s134 = sshll.u32 [#allocation9], 4
      %s135 = int_to_ptr.vmem [resolvable:$true] %s134
      %137 = dma.vmem_to_hbm [thread:$0]  %s135, 16, %s5, [#allocation4]
    $region37: #{tpu_custom_call.1} parent=1 // pred_fallthru
      _
    // Predicated region
    $region38: #{tpu_custom_call.1} parent=1 // pred_check
      _
    $region39: #{tpu_custom_call.1} parent=1 // pred_check_branch
      %139 = sbr.rel (0) target = $region41
    $region40: #{tpu_custom_call.1} parent=1 // pred_region
      %140 = dma.done [#allocation4], 16
    $region41: #{tpu_custom_call.1} parent=1 // pred_fallthru
      _
    %141 = vsyncpa [#allocation4], 1
    %142 = vsyncpa [#allocation5], 1
    %143 = vsyncpa [#allocation7], 1

</llo_original>
